<compile_context>
chip_gen: v7x
topology: tpu7x:2x2x1
jax: 0.10.0
libtpu: 0.0.40
codegen_flags: <defaults>
</compile_context>

<pallas_src>
import jax
import jax.numpy as jnp
import numpy as np
from jax.experimental import pallas as pl
from jax.experimental.pallas import tpu as pltpu

LEAKY_SLOPE = 0.2

_HAS_HW_NORMAL = hasattr(pltpu, "stateful_normal") and hasattr(pltpu, "prng_seed")
_hw_normal_failed = False      # flipped if the hardware-PRNG path fails to lower
_hw_normal_validated = False   # first successful run validated synchronously


def _sublanes(dtype) -> int:
    """Sublane packing of one vreg for this dtype (8 f32, 16 bf16, 32 int8)."""
    return {4: 8, 2: 16, 1: 32}.get(jnp.dtype(dtype).itemsize, 8)


def _choose_tiles(R, T, itemsize, sub, target_bytes):
    """Pick a (rows, lanes) block: lanes a multiple of 128 (or full T when
    T < 128), rows a multiple of the sublane count (or full R), with
    rows * lanes * itemsize close to target_bytes."""
    min_rows = min(R, sub)
    if T <= 128:
        t_tile = T
    else:
        lane_budget = max(128, (target_bytes // (min_rows * itemsize)) // 128 * 128)
        t_tile = min((T // 128) * 128, lane_budget)
    if R <= sub:
        r_tile = R
    else:
        row_budget = max(sub, (target_bytes // (t_tile * itemsize)) // sub * sub)
        r_tile = min((R // sub) * sub, row_budget)
    # v7x megacore: a big single-block problem would serialize onto one
    # TensorCore; split it so both cores get work.
    if (pl.cdiv(R, r_tile) * pl.cdiv(T, t_tile) == 1
            and R * T * itemsize > (1 << 20)):
        if t_tile >= 256:
            t_tile = (t_tile // 2) // 128 * 128
        elif r_tile >= 2 * sub:
            r_tile = (r_tile // 2) // sub * sub
    return r_tile, t_tile


def _adain_rng_kernel(seed_ref, x_ref, w_ref, o_ref):
    """In-kernel gaussian path.
    x_ref/o_ref: (r_tile, t_tile); w_ref: (r_tile, 1) f32; seed_ref: (1,) SMEM."""
    # Independent stream per grid tile (and per v7x TensorCore), so the result
    # does not depend on which core executes which tile.
    pltpu.prng_seed(seed_ref[0], pl.program_id(0), pl.program_id(1))
    noise = pltpu.stateful_normal(x_ref.shape, jnp.float32)
    y = x_ref[...].astype(jnp.float32) + noise * w_ref[...]
    # LeakyReLU(0.2): for slope in (0, 1), max(y, slope*y) == leaky_relu(y).
    o_ref[...] = jnp.maximum(y, LEAKY_SLOPE * y).astype(o_ref.dtype)


def _adain_ext_noise_kernel(x_ref, n_ref, w_ref, o_ref):
    """Fallback path: gaussian noise streamed from HBM."""
    y = x_ref[...].astype(jnp.float32) + n_ref[...].astype(jnp.float32) * w_ref[...]
    o_ref[...] = jnp.maximum(y, LEAKY_SLOPE * y).astype(o_ref.dtype)


def adain_forward(x: jax.Array, weight: jax.Array, key: jax.Array, *,
                  target_block_bytes: int = 4 << 20) -> jax.Array:
    """x: (B, C, T); weight: (C,); key: jax PRNG key for the gaussian noise."""
    global _hw_normal_failed, _hw_normal_validated
    B, C, T = x.shape
    assert weight.shape == (C,)
    dtype = x.dtype
    itemsize = jnp.dtype(dtype).itemsize
    R = B * C
    sub = _sublanes(dtype)

    r_tile, t_tile = _choose_tiles(R, T, itemsize, sub, target_block_bytes)
    grid = (pl.cdiv(R, r_tile), pl.cdiv(T, t_tile))

    x2 = x.reshape(R, T)
    # One f32 scale per row (row b*C + c uses weight[c]); kept in f32 so the
    # scale/add happens in f32 even for bf16 activations.
    w_rows = jnp.tile(weight.astype(jnp.float32).reshape(1, C), (B, 1)).reshape(R, 1)

    # Index maps receive (*grid_ids, *scalar_prefetch_refs); the trailing *_
    # absorbs the prefetched seed ref in the RNG path (nothing in the fallback).
    x_spec = pl.BlockSpec((r_tile, t_tile), lambda r, t, *_: (r, t))
    w_spec = pl.BlockSpec((r_tile, 1), lambda r, t, *_: (r, 0))
    o_spec = pl.BlockSpec((r_tile, t_tile), lambda r, t, *_: (r, t))

    cparams = pltpu.CompilerParams(
        # Purely elementwise: both axes parallel (v7x shards across its two
        # TensorCores; neutral on v5e/v6e).
        dimension_semantics=("parallel", "parallel"),
        # 2 streamed arrays x 2 pipeline buffers x <=4 MiB blocks ~= 16 MiB;
        # 32 MiB gives headroom on every generation (v7x physical = 64 MiB).
        vmem_limit_bytes=32 * 1024 * 1024,
    )

    out2 = None
    if _HAS_HW_NORMAL and not _hw_normal_failed:
        try:
            seed = jax.random.randint(key, (1,), 0, jnp.iinfo(jnp.int32).max,
                                      dtype=jnp.int32)
            out2 = pl.pallas_call(
                _adain_rng_kernel,
                out_shape=jax.ShapeDtypeStruct((R, T), dtype),
                grid_spec=pltpu.PrefetchScalarGridSpec(
                    num_scalar_prefetch=1,
                    grid=grid,
                    in_specs=[x_spec, w_spec],
                    out_specs=o_spec,
                ),
                compiler_params=cparams,
                cost_estimate=pl.CostEstimate(
                    flops=4 * R * T,                 # scale + add + leaky max
                    transcendentals=2 * R * T,       # in-kernel normal draw
                    bytes_accessed=(2 * R * T + R) * itemsize,
                ),
            )(seed, x2, w_rows)
            if not _hw_normal_validated:
                out2 = jax.block_until_ready(out2)
                _hw_normal_validated = True
        except Exception:
            # TODO(synk): drop this fallback once the stateful hardware PRNG
            # lowers on every deployment target (incl. interpret mode).
            _hw_normal_failed = True
            out2 = None

    if out2 is None:
        noise = jax.random.normal(key, (R, T), dtype=dtype)
        out2 = pl.pallas_call(
            _adain_ext_noise_kernel,
            out_shape=jax.ShapeDtypeStruct((R, T), dtype),
            grid=grid,
            in_specs=[x_spec, x_spec, w_spec],
            out_specs=o_spec,
            compiler_params=cparams,
            cost_estimate=pl.CostEstimate(
                flops=4 * R * T,
                transcendentals=0,
                bytes_accessed=(3 * R * T + R) * itemsize,
            ),
        )(x2, noise, w_rows)

    return out2.reshape(B, C, T)


if __name__ == "__main__":
    root = jax.random.PRNGKey(0)
    kx, kn, kx2, kn2, kn3 = jax.random.split(root, 5)

    # 1) Small example at the module's natural (B, C, T) shape.
    B, C, T = 2, 4, 16
    x = jax.random.normal(kx, (B, C, T), dtype=jnp.float32)
    weight = jnp.ones((C,), dtype=jnp.float32)   # module init: weight = ones(C)
    out = jax.block_until_ready(adain_forward(x, weight, kn))
    assert out.shape == (B, C, T)
    assert out.dtype == jnp.float32
    assert bool(jnp.all(jnp.isfinite(out)))

    # 2) weight == 0 -> the noise contribution vanishes; deterministic check of
    #    the add + LeakyReLU path against a pure-JAX reference.
    w0 = jnp.zeros((C,), dtype=jnp.float32)
    out0 = jax.block_until_ready(adain_forward(x, w0, kn))
    ref0 = jnp.where(x >= 0, x, LEAKY_SLOPE * x)
    np.testing.assert_allclose(np.asarray(out0), np.asarray(ref0),
                               rtol=1e-6, atol=1e-6)

    # 3) Statistical check of the gaussian: invert the LeakyReLU, recover
    #    g = noise * weight[c], and verify per-channel std ~ weight[c] and
    #    ~zero mean (loose, many-sigma-safe tolerances).
    Bs, Cs, Ts = 2, 4, 4096
    xs = jax.random.normal(kx2, (Bs, Cs, Ts), dtype=jnp.float32)
    ws = jnp.array([0.5, 1.0, 1.5, 2.0], dtype=jnp.float32)
    outs = jax.block_until_ready(adain_forward(xs, ws, kn2))
    ys = jnp.where(outs >= 0, outs, outs / LEAKY_SLOPE)   # exact LeakyReLU inverse
    g = ys - xs                                            # = noise * weight[c]
    std_c = jnp.std(g, axis=(0, 2))
    np.testing.assert_allclose(np.asarray(std_c), np.asarray(ws), rtol=0.1)
    mean_std = float(jnp.mean(g / ws[None, :, None]))
    assert abs(mean_std) < 0.05, mean_std

    # 4) Different grid tiles must draw different noise (per-tile seeding):
    #    force several time tiles and compare the recovered noise across them.
    xt = jnp.zeros((2, 4, 2048), dtype=jnp.float32)
    wt = jnp.ones((4,), dtype=jnp.float32)
    outt = jax.block_until_ready(
        adain_forward(xt, wt, kn3, target_block_bytes=16 * 1024))
    yt = jnp.where(outt >= 0, outt, outt / LEAKY_SLOPE)   # == noise (x=0, w=1)
    tile0 = np.asarray(yt[..., 0:512])
    tile1 = np.asarray(yt[..., 512:1024])
    assert not np.allclose(tile0, tile1), "identical noise across grid tiles"

    print("KERNEL_OK")
</pallas_src>

<mosaic_0001>
module attributes {stable_mosaic.version = 11 : i64} {
  func.func @_adain_rng_kernel(%arg0: i32, %arg1: i32, %arg2: memref<1xi32, #tpu.memory_space<smem>>, %arg3: memref<8x16xf32, #tpu.memory_space<vmem>>, %arg4: memref<8x1xf32, #tpu.memory_space<vmem>>, %arg5: memref<8x16xf32, #tpu.memory_space<vmem>>) attributes {dimension_semantics = [#tpu.dimension_semantics<parallel>, #tpu.dimension_semantics<parallel>], iteration_bounds = array<i64: 1, 1>, scalar_prefetch = 1 : i64, scratch_operands = 0 : i64, tpu.core_type = #tpu.core_type<tc>, window_params = [{transform_indices = @transform_0, window_bounds = array<i64: 8, 16>}, {transform_indices = @transform_1, window_bounds = array<i64: 8, 1>}, {transform_indices = @transform_2, window_bounds = array<i64: 8, 16>}]} {
    %c0 = arith.constant 0 : index
    %0 = memref.load %arg2[%c0] : memref<1xi32, #tpu.memory_space<smem>>
    "tpu.prng_set_seed_32"(%0, %arg0, %arg1) : (i32, i32, i32) -> ()
    %c0_i32 = arith.constant 0 : i32
    %c0_i32_0 = arith.constant 0 : i32
    %cst = arith.constant -0.99999994 : f32
    %cst_1 = arith.constant 1.000000e+00 : f32
    %1 = vector.broadcast %cst : f32 to vector<1x1xf32>
    %2 = vector.broadcast %cst_1 : f32 to vector<1x1xf32>
    %3 = "tpu.prng_random_bits"() : () -> vector<8x16xi32>
    %c9_i32 = arith.constant 9 : i32
    %4 = vector.broadcast %c9_i32 : i32 to vector<8x16xi32>
    %5 = arith.shrui %3, %4 : vector<8x16xi32>
    %c1065353216_i32 = arith.constant 1065353216 : i32
    %6 = vector.broadcast %c1065353216_i32 : i32 to vector<8x16xi32>
    %7 = arith.ori %5, %6 : vector<8x16xi32>
    %8 = tpu.bitcast %7 : vector<8x16xi32> -> vector<8x16xf32>
    %cst_2 = arith.constant 1.000000e+00 : f32
    %9 = vector.broadcast %cst_2 : f32 to vector<8x16xf32>
    %10 = arith.subf %8, %9 : vector<8x16xf32>
    %11 = arith.subf %2, %1 : vector<1x1xf32>
    %12 = vector.broadcast %11 : vector<1x1xf32> to vector<8x16xf32>
    %13 = arith.mulf %10, %12 : vector<8x16xf32>
    %14 = vector.broadcast %1 : vector<1x1xf32> to vector<8x16xf32>
    %15 = arith.addf %13, %14 : vector<8x16xf32>
    %16 = vector.broadcast %1 : vector<1x1xf32> to vector<8x16xf32>
    %17 = arith.maximumf %16, %15 : vector<8x16xf32>
    %cst_3 = arith.constant 0.000000e+00 : f32
    %18 = vector.broadcast %cst_3 : f32 to vector<8x16xf32>
    %19 = arith.subf %18, %17 : vector<8x16xf32>
    %20 = arith.mulf %17, %19 : vector<8x16xf32>
    %21 = math.log1p %20 : vector<8x16xf32>
    %cst_4 = arith.constant 0.000000e+00 : f32
    %22 = vector.broadcast %cst_4 : f32 to vector<8x16xf32>
    %23 = arith.subf %22, %21 : vector<8x16xf32>
    %cst_5 = arith.constant 5.000000e+00 : f32
    %24 = vector.broadcast %cst_5 : f32 to vector<8x16xf32>
    %25 = arith.cmpf olt, %23, %24 : vector<8x16xf32>
    %cst_6 = arith.constant 2.500000e+00 : f32
    %26 = vector.broadcast %cst_6 : f32 to vector<8x16xf32>
    %27 = arith.subf %23, %26 : vector<8x16xf32>
    %28 = math.sqrt %23 : vector<8x16xf32>
    %cst_7 = arith.constant 3.000000e+00 : f32
    %29 = vector.broadcast %cst_7 : f32 to vector<8x16xf32>
    %30 = arith.subf %28, %29 : vector<8x16xf32>
    %31 = arith.select %25, %27, %30 : vector<8x16xi1>, vector<8x16xf32>
    %cst_8 = arith.constant 2.81022636E-8 : f32
    %cst_9 = arith.constant -2.00214257E-4 : f32
    %32 = vector.broadcast %cst_8 : f32 to vector<8x16xf32>
    %33 = vector.broadcast %cst_9 : f32 to vector<8x16xf32>
    %34 = arith.select %25, %32, %33 : vector<8x16xi1>, vector<8x16xf32>
    %cst_10 = arith.constant 3.43273939E-7 : f32
    %cst_11 = arith.constant 1.00950558E-4 : f32
    %35 = vector.broadcast %cst_10 : f32 to vector<8x16xf32>
    %36 = vector.broadcast %cst_11 : f32 to vector<8x16xf32>
    %37 = arith.select %25, %35, %36 : vector<8x16xi1>, vector<8x16xf32>
    %38 = arith.mulf %34, %31 : vector<8x16xf32>
    %39 = arith.addf %37, %38 : vector<8x16xf32>
    %cst_12 = arith.constant -3.5233877E-6 : f32
    %cst_13 = arith.constant 0.00134934322 : f32
    %40 = vector.broadcast %cst_12 : f32 to vector<8x16xf32>
    %41 = vector.broadcast %cst_13 : f32 to vector<8x16xf32>
    %42 = arith.select %25, %40, %41 : vector<8x16xi1>, vector<8x16xf32>
    %43 = arith.mulf %39, %31 : vector<8x16xf32>
    %44 = arith.addf %42, %43 : vector<8x16xf32>
    %cst_14 = arith.constant -4.39150654E-6 : f32
    %cst_15 = arith.constant -0.00367342844 : f32
    %45 = vector.broadcast %cst_14 : f32 to vector<8x16xf32>
    %46 = vector.broadcast %cst_15 : f32 to vector<8x16xf32>
    %47 = arith.select %25, %45, %46 : vector<8x16xi1>, vector<8x16xf32>
    %48 = arith.mulf %44, %31 : vector<8x16xf32>
    %49 = arith.addf %47, %48 : vector<8x16xf32>
    %cst_16 = arith.constant 2.1858087E-4 : f32
    %cst_17 = arith.constant 0.00573950773 : f32
    %50 = vector.broadcast %cst_16 : f32 to vector<8x16xf32>
    %51 = vector.broadcast %cst_17 : f32 to vector<8x16xf32>
    %52 = arith.select %25, %50, %51 : vector<8x16xi1>, vector<8x16xf32>
    %53 = arith.mulf %49, %31 : vector<8x16xf32>
    %54 = arith.addf %52, %53 : vector<8x16xf32>
    %cst_18 = arith.constant -0.00125372503 : f32
    %cst_19 = arith.constant -0.0076224613 : f32
    %55 = vector.broadcast %cst_18 : f32 to vector<8x16xf32>
    %56 = vector.broadcast %cst_19 : f32 to vector<8x16xf32>
    %57 = arith.select %25, %55, %56 : vector<8x16xi1>, vector<8x16xf32>
    %58 = arith.mulf %54, %31 : vector<8x16xf32>
    %59 = arith.addf %57, %58 : vector<8x16xf32>
    %cst_20 = arith.constant -0.00417768164 : f32
    %cst_21 = arith.constant 0.00943887047 : f32
    %60 = vector.broadcast %cst_20 : f32 to vector<8x16xf32>
    %61 = vector.broadcast %cst_21 : f32 to vector<8x16xf32>
    %62 = arith.select %25, %60, %61 : vector<8x16xi1>, vector<8x16xf32>
    %63 = arith.mulf %59, %31 : vector<8x16xf32>
    %64 = arith.addf %62, %63 : vector<8x16xf32>
    %cst_22 = arith.constant 0.246640727 : f32
    %cst_23 = arith.constant 1.00167406 : f32
    %65 = vector.broadcast %cst_22 : f32 to vector<8x16xf32>
    %66 = vector.broadcast %cst_23 : f32 to vector<8x16xf32>
    %67 = arith.select %25, %65, %66 : vector<8x16xi1>, vector<8x16xf32>
    %68 = arith.mulf %64, %31 : vector<8x16xf32>
    %69 = arith.addf %67, %68 : vector<8x16xf32>
    %cst_24 = arith.constant 1.50140941 : f32
    %cst_25 = arith.constant 2.83297682 : f32
    %70 = vector.broadcast %cst_24 : f32 to vector<8x16xf32>
    %71 = vector.broadcast %cst_25 : f32 to vector<8x16xf32>
    %72 = arith.select %25, %70, %71 : vector<8x16xi1>, vector<8x16xf32>
    %73 = arith.mulf %69, %31 : vector<8x16xf32>
    %74 = arith.addf %72, %73 : vector<8x16xf32>
    %75 = math.absf %17 : vector<8x16xf32>
    %cst_26 = arith.constant 1.000000e+00 : f32
    %76 = vector.broadcast %cst_26 : f32 to vector<8x16xf32>
    %77 = arith.cmpf oeq, %75, %76 : vector<8x16xf32>
    %cst_27 = arith.constant 0x7F800000 : f32
    %78 = vector.broadcast %cst_27 : f32 to vector<8x16xf32>
    %79 = arith.mulf %78, %17 : vector<8x16xf32>
    %80 = arith.mulf %74, %17 : vector<8x16xf32>
    %81 = arith.select %77, %79, %80 : vector<8x16xi1>, vector<8x16xf32>
    %cst_28 = arith.constant 1.41421354 : f32
    %82 = vector.broadcast %cst_28 : f32 to vector<8x16xf32>
    %83 = arith.mulf %82, %81 : vector<8x16xf32>
    %c0_29 = arith.constant 0 : index
    %c0_30 = arith.constant 0 : index
    %84 = vector.load %arg3[%c0_29, %c0_30] : memref<8x16xf32, #tpu.memory_space<vmem>>, vector<8x16xf32>
    %c0_31 = arith.constant 0 : index
    %c0_32 = arith.constant 0 : index
    %85 = vector.load %arg4[%c0_31, %c0_32] : memref<8x1xf32, #tpu.memory_space<vmem>>, vector<8x1xf32>
    %86 = vector.broadcast %85 : vector<8x1xf32> to vector<8x16xf32>
    %87 = arith.mulf %83, %86 : vector<8x16xf32>
    %88 = arith.addf %84, %87 : vector<8x16xf32>
    %cst_33 = arith.constant 2.000000e-01 : f32
    %89 = vector.broadcast %cst_33 : f32 to vector<8x16xf32>
    %90 = arith.mulf %89, %88 : vector<8x16xf32>
    %91 = arith.maximumf %88, %90 : vector<8x16xf32>
    %c0_34 = arith.constant 0 : index
    %c0_35 = arith.constant 0 : index
    %92 = vector.load %arg5[%c0_34, %c0_35] : memref<8x16xf32, #tpu.memory_space<vmem>>, vector<8x16xf32>
    tpu.vector_store %arg5[%c0_34, %c0_35], %91 {strides = array<i32>} : memref<8x16xf32, #tpu.memory_space<vmem>>, vector<8x16xf32>,
    return
  }
  func.func @transform_0(%arg0: i32, %arg1: i32, %arg2: memref<1xi32, #tpu.memory_space<smem>>) -> (i32, i32) {
    %c0_i32 = arith.constant 0 : i32
    return %arg0, %arg1 : i32, i32
  }
  func.func @transform_1(%arg0: i32, %arg1: i32, %arg2: memref<1xi32, #tpu.memory_space<smem>>) -> (i32, i32) {
    %c0_i32 = arith.constant 0 : i32
    %c0_i32_0 = arith.constant 0 : i32
    return %arg0, %c0_i32 : i32, i32
  }
  func.func @transform_2(%arg0: i32, %arg1: i32, %arg2: memref<1xi32, #tpu.memory_space<smem>>) -> (i32, i32) {
    %c0_i32 = arith.constant 0 : i32
    return %arg0, %arg1 : i32, i32
  }
}

module attributes {stable_mosaic.version = 11 : i64} {
  func.func @_adain_ext_noise_kernel(%arg0: i32, %arg1: i32, %arg2: memref<8x16xf32, #tpu.memory_space<vmem>>, %arg3: memref<8x16xf32, #tpu.memory_space<vmem>>, %arg4: memref<8x1xf32, #tpu.memory_space<vmem>>, %arg5: memref<8x16xf32, #tpu.memory_space<vmem>>) attributes {dimension_semantics = [#tpu.dimension_semantics<parallel>, #tpu.dimension_semantics<parallel>], iteration_bounds = array<i64: 1, 1>, scalar_prefetch = 0 : i64, scratch_operands = 0 : i64, tpu.core_type = #tpu.core_type<tc>, window_params = [{transform_indices = @transform_0, window_bounds = array<i64: 8, 16>}, {transform_indices = @transform_1, window_bounds = array<i64: 8, 16>}, {transform_indices = @transform_2, window_bounds = array<i64: 8, 1>}, {transform_indices = @transform_3, window_bounds = array<i64: 8, 16>}]} {
    %c0 = arith.constant 0 : index
    %c0_0 = arith.constant 0 : index
    %0 = vector.load %arg2[%c0, %c0_0] : memref<8x16xf32, #tpu.memory_space<vmem>>, vector<8x16xf32>
    %c0_1 = arith.constant 0 : index
    %c0_2 = arith.constant 0 : index
    %1 = vector.load %arg3[%c0_1, %c0_2] : memref<8x16xf32, #tpu.memory_space<vmem>>, vector<8x16xf32>
    %c0_3 = arith.constant 0 : index
    %c0_4 = arith.constant 0 : index
    %2 = vector.load %arg4[%c0_3, %c0_4] : memref<8x1xf32, #tpu.memory_space<vmem>>, vector<8x1xf32>
    %3 = vector.broadcast %2 : vector<8x1xf32> to vector<8x16xf32>
    %4 = arith.mulf %1, %3 : vector<8x16xf32>
    %5 = arith.addf %0, %4 : vector<8x16xf32>
    %cst = arith.constant 2.000000e-01 : f32
    %6 = vector.broadcast %cst : f32 to vector<8x16xf32>
    %7 = arith.mulf %6, %5 : vector<8x16xf32>
    %8 = arith.maximumf %5, %7 : vector<8x16xf32>
    %c0_5 = arith.constant 0 : index
    %c0_6 = arith.constant 0 : index
    %9 = vector.load %arg5[%c0_5, %c0_6] : memref<8x16xf32, #tpu.memory_space<vmem>>, vector<8x16xf32>
    tpu.vector_store %arg5[%c0_5, %c0_6], %8 {strides = array<i32>} : memref<8x16xf32, #tpu.memory_space<vmem>>, vector<8x16xf32>,
    return
  }
  func.func @transform_0(%arg0: i32, %arg1: i32) -> (i32, i32) {
    %c0_i32 = arith.constant 0 : i32
    return %arg0, %arg1 : i32, i32
  }
  func.func @transform_1(%arg0: i32, %arg1: i32) -> (i32, i32) {
    %c0_i32 = arith.constant 0 : i32
    return %arg0, %arg1 : i32, i32
  }
  func.func @transform_2(%arg0: i32, %arg1: i32) -> (i32, i32) {
    %c0_i32 = arith.constant 0 : i32
    %c0_i32_0 = arith.constant 0 : i32
    return %arg0, %c0_i32 : i32, i32
  }
  func.func @transform_3(%arg0: i32, %arg1: i32) -> (i32, i32) {
    %c0_i32 = arith.constant 0 : i32
    return %arg0, %arg1 : i32, i32
  }
}

</mosaic_0001>

<llo_original>
// kernel: tpu_custom_call.1
$region0: #{tpu_custom_call.1}
  #allocation0 [shape = 'u32[]', space=smem, size = 0x4, offset = 0x4, fixed_abs, tag = 'smem constant byte address 0x4 - core index']
  #allocation1 [shape = 'u32[144,128]{1,0:T(1,128)}', space=vmem, size = 0x12000, scoped, tag = 'internal scratch']
  %s0 = inlined_call_operand.vmem [shape: f32[8,16], index: 0, kind: input, shape index: {}]
  %s1 = inlined_call_operand.hbm [shape: f32[8,16], index: 1, kind: input, shape index: {}]
  %s2 = inlined_call_operand.vmem [shape: f32[8,1], index: 2, kind: input, shape index: {}]
  %s3 = inlined_call_operand.hbm [shape: f32[8,16], index: 3, kind: output, shape index: {}]
  %s4 = sld [smem:[#allocation0]]
  $region26: #{tpu_custom_call.1} parent=0
    _
  %s6 = ssub.s32 1, %s4
  %s7 = scalar_select 0, %s6, %s4
  $region1: #{tpu_custom_call.1} parent=0
    #allocation2 [shape = 'u8[4096]{0}', space=vmem, size = 0x1000, scoped, tag = 'input window, operand 1, single buffered']
    #allocation3 [shape = 's32[1]{0}', space=sflag, size = 0x4, scoped, tag = 'scoped memory for tpu_custom_call.1']
    #allocation4 [shape = 's32[1]{0}', space=sflag, size = 0x4, scoped, tag = 'scoped memory for tpu_custom_call.1']
    #allocation5 [shape = 'u8[4096]{0}', space=vmem, size = 0x1000, scoped, tag = 'output window, operand 0, single buffered']
    %8 = vsyncpa [#allocation3], 0
    %9 = vsyncpa [#allocation4], 0
    // Predicated region
    $region2: #{tpu_custom_call.1} parent=1 // pred_check
      _
    $region3: #{tpu_custom_call.1} parent=1 // pred_check_branch
      %11 = sbr.rel (0) target = $region5
    $region4: #{tpu_custom_call.1} parent=1 // pred_region
      _
    $region5: #{tpu_custom_call.1} parent=1 // pred_fallthru
      _
    // Predicated region
    $region6: #{tpu_custom_call.1} parent=1 // pred_check
      _
    $region7: #{tpu_custom_call.1} parent=1 // pred_check_branch
      %13 = sbr.rel (0) target = $region9
    $region8: #{tpu_custom_call.1} parent=1 // pred_region
      %s15 = ssub.s32 128, 128
      %16 = vsyncadd [#allocation3], %s15
      %s18 = sshll.u32 [#allocation2], 4
      %s19 = int_to_ptr.vmem [resolvable:$true] %s18
      %21 = dma.hbm_to_vmem [thread:$0]  %s1, 128, %s19, [#allocation3]
    $region9: #{tpu_custom_call.1} parent=1 // pred_fallthru
      _
    // Predicated region
    $region10: #{tpu_custom_call.1} parent=1 // pred_check
      _
    $region11: #{tpu_custom_call.1} parent=1 // pred_check_branch
      %23 = sbr.rel (0) target = $region13
    $region12: #{tpu_custom_call.1} parent=1 // pred_region
      _
    $region13: #{tpu_custom_call.1} parent=1 // pred_fallthru
      _
    // Predicated region
    $region14: #{tpu_custom_call.1} parent=1 // pred_check
      _
    $region15: #{tpu_custom_call.1} parent=1 // pred_check_branch
      %25 = sbr.rel (0) target = $region17
    $region16: #{tpu_custom_call.1} parent=1 // pred_region
      %26 = dma.done [#allocation3], 128
    $region17: #{tpu_custom_call.1} parent=1 // pred_fallthru
      _
    %v27 = vld [vmem:[%s0] sm:$0xff]
    %v28 = vld [vmem:[#allocation2] sm:$0xff]
    %v29 = vld [vmem:[%s2] sm:$0xff]
    %31 = vset.pattern.permute.xlu0 0
    %32 = vperm.xlu0 %31, %v29
    %v33 = vpop.permute.xlu0 %32
    %v35 = vmul.f32 %v28, %v33
    %v36 = vadd.f32 %v27, %v35
    %v37 = vmul.f32 %v36, 0.2
    %v38 = vmax.f32 %v36, %v37
    %vm39 = vcmask 130048
    %40 = vst.msk [vmem:[#allocation5] sm:$0xff] %vm39, %v38
    // Predicated region
    $region18: #{tpu_custom_call.1} parent=1 // pred_check
      _
    $region19: #{tpu_custom_call.1} parent=1 // pred_check_branch
      %42 = sbr.rel (0) target = $region21
    $region20: #{tpu_custom_call.1} parent=1 // pred_region
      %s44 = ssub.s32 128, 128
      %45 = vsyncadd [#allocation4], %s44
      %s47 = sshll.u32 [#allocation5], 4
      %s48 = int_to_ptr.vmem [resolvable:$true] %s47
      %50 = dma.vmem_to_hbm [thread:$0]  %s48, 128, %s3, [#allocation4]
    $region21: #{tpu_custom_call.1} parent=1 // pred_fallthru
      _
    // Predicated region
    $region22: #{tpu_custom_call.1} parent=1 // pred_check
      _
    $region23: #{tpu_custom_call.1} parent=1 // pred_check_branch
      %52 = sbr.rel (0) target = $region25
    $region24: #{tpu_custom_call.1} parent=1 // pred_region
      %53 = dma.done [#allocation4], 128
    $region25: #{tpu_custom_call.1} parent=1 // pred_fallthru
      _
    %54 = vsyncpa [#allocation3], 1
    %55 = vsyncpa [#allocation4], 1

</llo_original>
